<compile_context>
chip_gen: v6e
topology: v6e:2x2x1
jax: 0.10.0
libtpu: 0.0.40
codegen_flags: <defaults>
</compile_context>

<pallas_src>
import functools

import jax
import jax.numpy as jnp
from jax.experimental import pallas as pl
from jax.experimental.pallas import tpu as pltpu


def _make_conv_kernel(K, L_full):
    """Build the conv kernel for a given (static) kernel width and output length."""

    def kernel(x_ref, w_ref, b_ref, o_ref):
        # x_ref: (1, F_in, Lp)      padded input, one batch element (Lp = L + K - 1)
        # w_ref: (K, F_out, F_in)   w_ref[k] is the k-th tap as a matmul LHS
        # b_ref: (F_out, 1)         bias as a column (broadcasts over lanes)
        # o_ref: (1, F_out, L_full) NCL output tile, length on lanes (lane-dense)
        x = x_ref[0]                                           # (F_in, Lp)
        acc = jnp.dot(w_ref[0], x[:, 0:L_full],
                      preferred_element_type=jnp.float32)      # (F_out, L_full)
        for k in range(1, K):                                  # small static unroll
            xk = x[:, k:k + L_full]                            # static contiguous slice
            acc = acc + jnp.dot(w_ref[k], xk,
                                preferred_element_type=jnp.float32)
        acc = acc + b_ref[...]                                 # (F_out, 1) broadcast
        o_ref[0] = acc.astype(o_ref.dtype)

    return kernel


@functools.partial(jax.jit, static_argnames=("K", "stride", "pbc"))
def cnn_real_layer_1d(x, weight, bias, *, K, stride=1, pbc=True):
    """x: (B, F_in, L); weight: (F_out, F_in, K); bias: (F_out,).

    Returns (B, F_out, L_out) in PyTorch NCL layout.
    """
    B, F_in, L = x.shape
    F_out = weight.shape[0]

    # periodic_padding: only K-1 extra columns (negligible HBM), no im2col blow-up.
    mode = "wrap" if pbc else "constant"
    xpad = jnp.pad(x, ((0, 0), (0, 0), (0, K - 1)), mode=mode)   # (B, F_in, Lp)
    Lp = L + K - 1
    L_full = Lp - K + 1                   # stride-1 output length (== L)
    L_out = (Lp - K) // stride + 1        # Conv1d output length for this stride

    # weight (F_out, F_in, K) -> (K, F_out, F_in): each tap is an (F_out, F_in) matmul.
    w_k = jnp.transpose(weight, (2, 0, 1))
    b_col = bias.reshape(F_out, 1)

    flops = 2 * B * F_out * F_in * K * L_full
    bytes_accessed = (xpad.size * xpad.dtype.itemsize
                      + w_k.size * w_k.dtype.itemsize
                      + b_col.size * b_col.dtype.itemsize
                      + B * F_out * L_full * x.dtype.itemsize)

    out = pl.pallas_call(
        _make_conv_kernel(K, L_full),
        out_shape=jax.ShapeDtypeStruct((B, F_out, L_full), x.dtype),
        grid=(B,),
        in_specs=[
            pl.BlockSpec((1, F_in, Lp), lambda b: (b, 0, 0)),
            pl.BlockSpec((K, F_out, F_in), lambda b: (0, 0, 0)),   # grid-invariant
            pl.BlockSpec((F_out, 1), lambda b: (0, 0)),            # grid-invariant
        ],
        out_specs=pl.BlockSpec((1, F_out, L_full), lambda b: (b, 0, 0)),
        compiler_params=pltpu.CompilerParams(
            dimension_semantics=("parallel",)),
        cost_estimate=pl.CostEstimate(
            flops=flops, transcendentals=0, bytes_accessed=bytes_accessed),
    )(xpad, w_k, b_col)

    # Strided conv == stride-1 conv sampled at positions l*stride (no-op for stride==1).
    if stride != 1:
        out = out[:, :, ::stride][:, :, :L_out]
    return out


def reference_conv1d(x, weight, bias, K, stride, pbc=True):
    """Pure-JAX reference of the same forward pass (pad + VALID conv + bias)."""
    mode = "wrap" if pbc else "constant"
    xpad = jnp.pad(x, ((0, 0), (0, 0), (0, K - 1)), mode=mode)
    out = jax.lax.conv_general_dilated(
        xpad, weight,
        window_strides=(stride,),
        padding="VALID",
        dimension_numbers=("NCH", "OIH", "NCH"),
    )
    return out + bias[None, :, None]


if __name__ == "__main__":
    # Module config consistent with the 1d branch of CNN_real_layer
    B, F_in, F_out, L, K = 2, 4, 8, 16, 3

    key = jax.random.PRNGKey(0)
    kx, kw, kb = jax.random.split(key, 3)

    x = jax.random.normal(kx, (B, F_in, L), dtype=jnp.float32)

    # Conv1d-style init: U(-1/sqrt(F_in*K), 1/sqrt(F_in*K))
    bound = 1.0 / jnp.sqrt(jnp.array(F_in * K, jnp.float32))
    weight = jax.random.uniform(kw, (F_out, F_in, K), jnp.float32, -bound, bound)
    bias = jax.random.uniform(kb, (F_out,), jnp.float32, -bound, bound)

    # Main case: pbc=True, stride=1 (module defaults)
    y = cnn_real_layer_1d(x, weight, bias, K=K, stride=1, pbc=True)
    y = jax.block_until_ready(y)
    y_ref = reference_conv1d(x, weight, bias, K, 1, pbc=True)
    assert y.shape == y_ref.shape, (y.shape, y_ref.shape)
    assert jnp.allclose(y, y_ref, atol=1e-5, rtol=1e-5), float(jnp.max(jnp.abs(y - y_ref)))

    # Extra checks: pbc=False and stride=2 branches of the wrapper.
    y2 = jax.block_until_ready(cnn_real_layer_1d(x, weight, bias, K=K, stride=1, pbc=False))
    y2_ref = reference_conv1d(x, weight, bias, K, 1, pbc=False)
    assert jnp.allclose(y2, y2_ref, atol=1e-5, rtol=1e-5)

    y3 = jax.block_until_ready(cnn_real_layer_1d(x, weight, bias, K=K, stride=2, pbc=True))
    y3_ref = reference_conv1d(x, weight, bias, K, 2, pbc=True)
    assert y3.shape == y3_ref.shape, (y3.shape, y3_ref.shape)
    assert jnp.allclose(y3, y3_ref, atol=1e-5, rtol=1e-5)

    print("KERNEL_OK")
</pallas_src>

<mosaic_0001>
module attributes {stable_mosaic.version = 11 : i64} {
  func.func @kernel(%arg0: i32, %arg1: memref<1x4x18xf32, #tpu.memory_space<vmem>>, %arg2: memref<3x8x4xf32, #tpu.memory_space<vmem>>, %arg3: memref<8x1xf32, #tpu.memory_space<vmem>>, %arg4: memref<1x8x16xf32, #tpu.memory_space<vmem>>) attributes {dimension_semantics = [#tpu.dimension_semantics<parallel>], iteration_bounds = array<i64: 2>, scalar_prefetch = 0 : i64, scratch_operands = 0 : i64, tpu.core_type = #tpu.core_type<tc>, window_params = [{transform_indices = @transform_0, window_bounds = array<i64: 1, 4, 18>}, {pipeline_mode = #tpu.pipeline_mode<synchronous>, transform_indices = @transform_1, window_bounds = array<i64: 3, 8, 4>}, {pipeline_mode = #tpu.pipeline_mode<synchronous>, transform_indices = @transform_2, window_bounds = array<i64: 8, 1>}, {transform_indices = @transform_3, window_bounds = array<i64: 1, 8, 16>}]} {
    %c0 = arith.constant 0 : index
    %c0_0 = arith.constant 0 : index
    %c0_1 = arith.constant 0 : index
    %0 = vector.load %arg1[%c0, %c0_0, %c0_1] : memref<1x4x18xf32, #tpu.memory_space<vmem>>, vector<1x4x18xf32>
    %1 = vector.shape_cast %0 : vector<1x4x18xf32> to vector<4x18xf32>
    %c0_2 = arith.constant 0 : index
    %c0_3 = arith.constant 0 : index
    %c0_4 = arith.constant 0 : index
    %2 = vector.load %arg2[%c0_2, %c0_3, %c0_4] : memref<3x8x4xf32, #tpu.memory_space<vmem>>, vector<1x8x4xf32>
    %3 = vector.shape_cast %2 : vector<1x8x4xf32> to vector<8x4xf32>
    %4 = vector.extract_strided_slice %1 {offsets = [0, 0], sizes = [4, 16], strides = [1, 1]} : vector<4x18xf32> to vector<4x16xf32>
    %cst = arith.constant dense<0.000000e+00> : vector<8x16xf32>
    %5 = tpu.matmul %3, %4, %cst {dimension_numbers = #tpu.dot_dimension_numbers<[1], [0], [0], [1], [0, 0, 1, 1], [], []>} : vector<8x4xf32>, vector<4x16xf32>, vector<8x16xf32> -> vector<8x16xf32>
    %6 = vector.extract_strided_slice %1 {offsets = [0, 1], sizes = [4, 16], strides = [1, 1]} : vector<4x18xf32> to vector<4x16xf32>
    %c1 = arith.constant 1 : index
    %c0_5 = arith.constant 0 : index
    %c0_6 = arith.constant 0 : index
    %7 = vector.load %arg2[%c1, %c0_5, %c0_6] : memref<3x8x4xf32, #tpu.memory_space<vmem>>, vector<1x8x4xf32>
    %8 = vector.shape_cast %7 : vector<1x8x4xf32> to vector<8x4xf32>
    %cst_7 = arith.constant dense<0.000000e+00> : vector<8x16xf32>
    %9 = tpu.matmul %8, %6, %cst_7 {dimension_numbers = #tpu.dot_dimension_numbers<[1], [0], [0], [1], [0, 0, 1, 1], [], []>} : vector<8x4xf32>, vector<4x16xf32>, vector<8x16xf32> -> vector<8x16xf32>
    %10 = arith.addf %5, %9 : vector<8x16xf32>
    %11 = vector.extract_strided_slice %1 {offsets = [0, 2], sizes = [4, 16], strides = [1, 1]} : vector<4x18xf32> to vector<4x16xf32>
    %c2 = arith.constant 2 : index
    %c0_8 = arith.constant 0 : index
    %c0_9 = arith.constant 0 : index
    %12 = vector.load %arg2[%c2, %c0_8, %c0_9] : memref<3x8x4xf32, #tpu.memory_space<vmem>>, vector<1x8x4xf32>
    %13 = vector.shape_cast %12 : vector<1x8x4xf32> to vector<8x4xf32>
    %cst_10 = arith.constant dense<0.000000e+00> : vector<8x16xf32>
    %14 = tpu.matmul %13, %11, %cst_10 {dimension_numbers = #tpu.dot_dimension_numbers<[1], [0], [0], [1], [0, 0, 1, 1], [], []>} : vector<8x4xf32>, vector<4x16xf32>, vector<8x16xf32> -> vector<8x16xf32>
    %15 = arith.addf %10, %14 : vector<8x16xf32>
    %c0_11 = arith.constant 0 : index
    %c0_12 = arith.constant 0 : index
    %16 = vector.load %arg3[%c0_11, %c0_12] : memref<8x1xf32, #tpu.memory_space<vmem>>, vector<8x1xf32>
    %17 = vector.broadcast %16 : vector<8x1xf32> to vector<8x16xf32>
    %18 = arith.addf %15, %17 : vector<8x16xf32>
    %c0_13 = arith.constant 0 : index
    %c0_14 = arith.constant 0 : index
    %c0_15 = arith.constant 0 : index
    %19 = vector.load %arg4[%c0_13, %c0_14, %c0_15] : memref<1x8x16xf32, #tpu.memory_space<vmem>>, vector<1x8x16xf32>
    %20 = vector.shape_cast %19 : vector<1x8x16xf32> to vector<8x16xf32>
    %21 = vector.shape_cast %18 : vector<8x16xf32> to vector<1x8x16xf32>
    tpu.vector_store %arg4[%c0_13, %c0_14, %c0_15], %21 {strides = array<i32>} : memref<1x8x16xf32, #tpu.memory_space<vmem>>, vector<1x8x16xf32>,
    return
  }
  func.func @transform_0(%arg0: i32) -> (i32, i32, i32) {
    %c0_i32 = arith.constant 0 : i32
    %c0_i32_0 = arith.constant 0 : i32
    %c0_i32_1 = arith.constant 0 : i32
    return %arg0, %c0_i32, %c0_i32_0 : i32, i32, i32
  }
  func.func @transform_1(%arg0: i32) -> (i32, i32, i32) {
    %c0_i32 = arith.constant 0 : i32
    %c0_i32_0 = arith.constant 0 : i32
    %c0_i32_1 = arith.constant 0 : i32
    %c0_i32_2 = arith.constant 0 : i32
    return %c0_i32, %c0_i32_0, %c0_i32_1 : i32, i32, i32
  }
  func.func @transform_2(%arg0: i32) -> (i32, i32) {
    %c0_i32 = arith.constant 0 : i32
    %c0_i32_0 = arith.constant 0 : i32
    %c0_i32_1 = arith.constant 0 : i32
    return %c0_i32, %c0_i32_0 : i32, i32
  }
  func.func @transform_3(%arg0: i32) -> (i32, i32, i32) {
    %c0_i32 = arith.constant 0 : i32
    %c0_i32_0 = arith.constant 0 : i32
    %c0_i32_1 = arith.constant 0 : i32
    return %arg0, %c0_i32, %c0_i32_0 : i32, i32, i32
  }
}

</mosaic_0001>

<llo_original>
// kernel: cnn_real_layer_1d.1
$region0: #{cnn_real_layer_1d.1}
  #allocation0 [shape = 'u32[]', space=smem, size = 0x4, offset = 0x4, fixed_abs, tag = 'smem constant byte address 0x4 - core index']
  #allocation1 [shape = 'u32[144,128]{1,0:T(1,128)}', space=vmem, size = 0x12000, scoped, tag = 'internal scratch']
  %s0 = inlined_call_operand.vmem [shape: f32[2,4,18], index: 0, kind: input, shape index: {}]
  %s1 = inlined_call_operand.vmem [shape: f32[3,8,4], index: 1, kind: input, shape index: {}]
  %s2 = inlined_call_operand.vmem [shape: f32[8,1], index: 2, kind: input, shape index: {}]
  %s3 = inlined_call_operand.hbm [shape: f32[2,8,16], index: 3, kind: output, shape index: {}]
  %s4 = sld [smem:[#allocation0]]
  $region45: #{cnn_real_layer_1d.1} parent=0
    _
  %s6 = ssub.s32 1, %s4
  %s7 = scalar_select 0, %s6, %s4
  $region1: #{cnn_real_layer_1d.1} parent=0
    #allocation2 [shape = 'u8[8192]{0}', space=vmem, size = 0x2000, scoped, tag = 'output window, operand 0']
    #allocation3 [shape = 's32[2]{0}', space=sflag, size = 0x8, scoped, tag = 'scoped memory for cnn_real_layer_1d.1']
    %8 = vsyncpa [#allocation3], 0
    %s9 = scalar_lea.sflag [#allocation3], 1
    %10 = vsyncpa %s9, 0
    loop: start=0, step=1, limit=4
    $region2: #{cnn_real_layer_1d.1} parent=1 // loop_pre_header
      _
    $region3: #{cnn_real_layer_1d.1} parent=1 // loop_header
      %s12 = sphi 0, %s16
      %p13 = scmp.ge.s32.totalorder %s12, 4
      %s22 = sphi 0, %s24
      %s25 = sphi 0, %s22
      %s26 = sphi 0, %s25
      %s42 = sphi 0, %s26
      %s46 = sphi 0, %s46
      %s48 = sphi 0, %s46
      %s49 = sphi 0, %s48
      %s63 = sphi 0, %s49
      %s67 = sphi 0, %s67
      %s69 = sphi 0, %s67
      %s70 = sphi 0, %s69
      %s84 = sphi 0, %s70
      %s90 = sphi 0, %s92
      %s93 = sphi 0, %s90
      %s94 = sphi 0, %s93
      %s110 = sphi 0, %s94
    $region4: #{cnn_real_layer_1d.1} parent=1 // loop_header_branch
      %15 = sbr.rel (%p13) target = $region8
    $region5: #{cnn_real_layer_1d.1} parent=1 // loop_body
      %s17 = ssub.s32 %s12, 1
      %s18 = ssub.s32 %s12, 2
      %s19 = sadd.s32 %s12, 1
      %s20 = ssub.s32 %s12, %s19
      %p21 = scmp.eq.s32.totalorder %s20, 0
      %s23 = sadd.s32 %s22, 1
      %s24 = scalar_select %p21, %s22, %s23
      %p27 = pneg %p21
      %p28 = scmp.eq.s32.totalorder %s12, 1
      %p29 = por %p27, %p28
      %p30 = scmp.ne.s32.totalorder %s22, %s25
      %p31 = scmp.eq.s32.totalorder %s12, 0
      %p32 = por %p30, %p31
      %p33 = scmp.ne.s32.totalorder %s22, %s25
      %p34 = scmp.eq.s32.totalorder %s17, 1
      %p35 = por %p33, %p34
      %p36 = scmp.ne.s32.totalorder %s25, %s26
      %p37 = scmp.eq.s32.totalorder %s17, 0
      %p38 = por %p36, %p37
      %p39 = scmp.ne.s32.totalorder %s25, %s26
      %p40 = scmp.eq.s32.totalorder %s18, 1
      %p41 = por %p39, %p40
      %p43 = scmp.ne.s32.totalorder %s26, %s42
      %p44 = scmp.eq.s32.totalorder %s18, 0
      %p45 = por %p43, %p44
      %s47 = sadd.s32 %s46, 1
      %p50 = scmp.eq.s32.totalorder %s12, 1
      %p51 = scmp.ne.s32.totalorder %s46, %s48
      %p52 = scmp.eq.s32.totalorder %s12, 0
      %p53 = por %p51, %p52
      %p54 = scmp.ne.s32.totalorder %s46, %s48
      %p55 = scmp.eq.s32.totalorder %s17, 1
      %p56 = por %p54, %p55
      %p57 = scmp.ne.s32.totalorder %s48, %s49
      %p58 = scmp.eq.s32.totalorder %s17, 0
      %p59 = por %p57, %p58
      %p60 = scmp.ne.s32.totalorder %s48, %s49
      %p61 = scmp.eq.s32.totalorder %s18, 1
      %p62 = por %p60, %p61
      %p64 = scmp.ne.s32.totalorder %s49, %s63
      %p65 = scmp.eq.s32.totalorder %s18, 0
      %p66 = por %p64, %p65
      %s68 = sadd.s32 %s67, 1
      %p71 = scmp.eq.s32.totalorder %s12, 1
      %p72 = scmp.ne.s32.totalorder %s67, %s69
      %p73 = scmp.eq.s32.totalorder %s12, 0
      %p74 = por %p72, %p73
      %p75 = scmp.ne.s32.totalorder %s67, %s69
      %p76 = scmp.eq.s32.totalorder %s17, 1
      %p77 = por %p75, %p76
      %p78 = scmp.ne.s32.totalorder %s69, %s70
      %p79 = scmp.eq.s32.totalorder %s17, 0
      %p80 = por %p78, %p79
      %p81 = scmp.ne.s32.totalorder %s69, %s70
      %p82 = scmp.eq.s32.totalorder %s18, 1
      %p83 = por %p81, %p82
      %p85 = scmp.ne.s32.totalorder %s70, %s84
      %p86 = scmp.eq.s32.totalorder %s18, 0
      %p87 = por %p85, %p86
      %s88 = ssub.s32 %s12, %s19
      %p89 = scmp.eq.s32.totalorder %s88, 0
      %s91 = sadd.s32 %s90, 1
      %s92 = scalar_select %p89, %s90, %s91
      %p95 = pneg %p89
      %p96 = scmp.eq.s32.totalorder %s12, 1
      %p97 = por %p95, %p96
      %p98 = scmp.ne.s32.totalorder %s90, %s93
      %p99 = scmp.eq.s32.totalorder %s12, 0
      %p100 = por %p98, %p99
      %p101 = scmp.ne.s32.totalorder %s90, %s93
      %p102 = scmp.eq.s32.totalorder %s17, 1
      %p103 = por %p101, %p102
      %p104 = scmp.ne.s32.totalorder %s93, %s94
      %p105 = scmp.eq.s32.totalorder %s17, 0
      %p106 = por %p104, %p105
      %p107 = scmp.ne.s32.totalorder %s93, %s94
      %p108 = scmp.eq.s32.totalorder %s18, 1
      %p109 = por %p107, %p108
      %p111 = scmp.ne.s32.totalorder %s94, %s110
      %p112 = scmp.eq.s32.totalorder %s18, 0
      %p113 = por %p111, %p112
      %p114 = scmp.le.s32.totalorder 1, %s12
      %p115 = scmp.lt.s32.totalorder %s12, 3
      %p116 = pnand %p114, %p115
      %p117 = pneg %p116
      // Predicated region
      $region9: #{cnn_real_layer_1d.1} parent=5 // pred_check
        _
      $region10: #{cnn_real_layer_1d.1} parent=5 // pred_check_branch
        %119 = sbr.rel (%p116) target = $region12
      $region11: #{cnn_real_layer_1d.1} parent=5 // pred_region
        %s120 = ssub.s32 %s12, 1
        // Predicated region
        $region13: #{cnn_real_layer_1d.1} parent=11 // pred_check
          %p121 = pneg %p59
        $region14: #{cnn_real_layer_1d.1} parent=11 // pred_check_branch
          %123 = sbr.rel (%p121) target = $region16
        $region15: #{cnn_real_layer_1d.1} parent=11 // pred_region
          _
        $region16: #{cnn_real_layer_1d.1} parent=11 // pred_fallthru
          _
        // Predicated region
        $region17: #{cnn_real_layer_1d.1} parent=11 // pred_check
          %p124 = pneg %p80
        $region18: #{cnn_real_layer_1d.1} parent=11 // pred_check_branch
          %126 = sbr.rel (%p124) target = $region20
        $region19: #{cnn_real_layer_1d.1} parent=11 // pred_region
          _
        $region20: #{cnn_real_layer_1d.1} parent=11 // pred_fallthru
          _
      $region12: #{cnn_real_layer_1d.1} parent=5 // pred_fallthru
        _
      %p127 = scmp.lt.s32.totalorder %s12, 2
      // Predicated region
      $region21: #{cnn_real_layer_1d.1} parent=5 // pred_check
        %p128 = pneg %p127
      $region22: #{cnn_real_layer_1d.1} parent=5 // pred_check_branch
        %130 = sbr.rel (%p128) target = $region24
      $region23: #{cnn_real_layer_1d.1} parent=5 // pred_region
        // Predicated region
        $region25: #{cnn_real_layer_1d.1} parent=23 // pred_check
          %p131 = pneg %p32
        $region26: #{cnn_real_layer_1d.1} parent=23 // pred_check_branch
          %133 = sbr.rel (%p131) target = $region28
        $region27: #{cnn_real_layer_1d.1} parent=23 // pred_region
          %p134 = scmp.lt.s32.totalorder %s12, 1
          %s135 = scalar_select %p134, %s12, 1
          %s136 = smul.addr %s135, 4
          %s137 = scalar_lea.vmem %s0, %s136
        $region28: #{cnn_real_layer_1d.1} parent=23 // pred_fallthru
          _
      $region24: #{cnn_real_layer_1d.1} parent=5 // pred_fallthru
        _
      %p138 = scmp.le.s32.totalorder 1, %s12
      %p139 = scmp.lt.s32.totalorder %s12, 3
      %p140 = pnand %p138, %p139
      %p141 = pneg %p140
      // Predicated region
      $region29: #{cnn_real_layer_1d.1} parent=5 // pred_check
        _
      $region30: #{cnn_real_layer_1d.1} parent=5 // pred_check_branch
        %143 = sbr.rel (%p140) target = $region32
      $region31: #{cnn_real_layer_1d.1} parent=5 // pred_region
        %s144 = ssub.s32 %s12, 1
        %p145 = scmp.lt.s32.totalorder %s17, 1
        %s146 = scalar_select %p145, %s17, 1
        %s147 = smul.addr %s146, 4
        %s148 = scalar_lea.vmem %s0, %s147
        %p149 = pneg %p38
        %p150 = pneg %p35
        %p151 = pneg %p59
        %p152 = pneg %p56
        %p153 = pneg %p80
        %p154 = pneg %p77
        %p155 = pneg %p106
        %p156 = pneg %p103
        %s157 = sand.u32 %s93, 1
        %s158 = scalar_lea.sflag [#allocation3], %s157
        %s159 = sand.u32 %s93, 1
        %s160 = smul.addr %s159, 8
        %s161 = scalar_lea.vmem [#allocation2], %s160
        %p162 = scmp.lt.s32.totalorder %s17, 1
        %s163 = scalar_select %p162, %s17, 1
        %s164 = smul.addr %s163, 4
        %s165 = scalar_lea.vmem %s0, %s164
        %v166 = vld [vmem:[%s165] sm:$0xf]
        %v167 = vld [vmem:[%s1] sm:$0xff]
        %s168 = scalar_lea.vmem %s1, 8
        %v169 = vld [vmem:[%s168] sm:$0xff]
        %171 = vrot.lane.b32.xlu0 %v166, 127
        %v172 = vpop.permute.xlu0 %171
        %vm173 = vcmask 31744
        %v175 = vsel %vm173, %v169, 0
        %vm177 = vcmask 1043456
        %v178 = vsel %vm177, %v172, 0
        %180 = vmatprep.subr.mxu0 0.0
        %181 = vmatpush1.msra.mxu0 0.0
        %182 = vmatprep.subr.mxu0 0.0
        %183 = vmatpush1.msra.mxu0 0.0
        %184 = vmatprep.subr.mxu0 0.0
        %185 = vmatpush1.msra.mxu0 0.0
        %186 = vmatprep.subr.mxu0 0.0
        %187 = vmatpush1.msra.mxu0 0.0
        %188 = vmatprep.subr.mxu0 0.0
        %189 = vmatpush1.msra.mxu0 0.0
        %190 = vmatprep.subr.mxu0 0.0
        %191 = vmatpush1.msra.mxu0 0.0
        %192 = vmatprep.subr.mxu0 0.0
        %193 = vmatpush1.msra.mxu0 0.0
        %194 = vmatprep.subr.mxu0 0.0
        %195 = vmatpush1.msra.mxu0 0.0
        %196 = vmatprep.subr.mxu0 0.0
        %197 = vmatpush1.msra.mxu0 0.0
        %198 = vmatprep.subr.mxu0 0.0
        %199 = vmatpush1.msra.mxu0 0.0
        %200 = vmatprep.subr.mxu0 0.0
        %201 = vmatpush1.msra.mxu0 0.0
        %202 = vmatprep.subr.mxu0 0.0
        %203 = vmatpush1.msra.mxu0 0.0
        %204 = vmatprep.subr.mxu0 0.0
        %205 = vmatpush1.msra.mxu0 0.0
        %206 = vmatprep.subr.mxu0 0.0
        %207 = vmatpush1.msra.mxu0 0.0
        %208 = vmatprep.subr.mxu0 0.0
        %209 = vmatpush1.msra.mxu0 0.0
        %210 = vmatprep.subr.mxu0 0.0
        %211 = vmatpush1.msra.mxu0 %v178
        %212 = vmatprep.subr.mxu0 0.0
        %213 = vmatpush2.msra.mxu0 0.0
        %214 = vmatprep.subr.mxu0 0.0
        %215 = vmatpush2.msra.mxu0 0.0
        %216 = vmatprep.subr.mxu0 0.0
        %217 = vmatpush2.msra.mxu0 0.0
        %218 = vmatprep.subr.mxu0 0.0
        %219 = vmatpush2.msra.mxu0 0.0
        %220 = vmatprep.subr.mxu0 0.0
        %221 = vmatpush2.msra.mxu0 0.0
        %222 = vmatprep.subr.mxu0 0.0
        %223 = vmatpush2.msra.mxu0 0.0
        %224 = vmatprep.subr.mxu0 0.0
        %225 = vmatpush2.msra.mxu0 0.0
        %226 = vmatprep.subr.mxu0 0.0
        %227 = vmatpush2.msra.mxu0 0.0
        %228 = vmatprep.subr.mxu0 0.0
        %229 = vmatpush2.msra.mxu0 0.0
        %230 = vmatprep.subr.mxu0 0.0
        %231 = vmatpush2.msra.mxu0 0.0
        %232 = vmatprep.subr.mxu0 0.0
        %233 = vmatpush2.msra.mxu0 0.0
        %234 = vmatprep.subr.mxu0 0.0
        %235 = vmatpush2.msra.mxu0 0.0
        %236 = vmatprep.subr.mxu0 0.0
        %237 = vmatpush2.msra.mxu0 0.0
        %238 = vmatprep.subr.mxu0 0.0
        %239 = vmatpush2.msra.mxu0 0.0
        %240 = vmatprep.subr.mxu0 0.0
        %241 = vmatpush2.msra.mxu0 0.0
        %242 = vmatprep.subr.mxu0 0.0
        %243 = vmatpush2.msra.mxu0 0.0
        %244 = vmatprep.mubr.f32.mxu0 0.0
        %245 = vmatmul.mubr.f32.gmra.mxu0 %v175
        %v246 = vpop.f32.mrf.mxu0
        %v247 = vadd.f32 0.0, %v246
        %v248 = vpop.f32.mrf.mxu0
        %249 = vdwg.mxu0
        %v251 = vsel %vm173, %v167, 0
        %v253 = vsel %vm177, %v166, 0
        %255 = vmatprep.subr.mxu0 0.0
        %256 = vmatpush1.msra.mxu0 0.0
        %257 = vmatprep.subr.mxu0 0.0
        %258 = vmatpush1.msra.mxu0 0.0
        %259 = vmatprep.subr.mxu0 0.0
        %260 = vmatpush1.msra.mxu0 0.0
        %261 = vmatprep.subr.mxu0 0.0
        %262 = vmatpush1.msra.mxu0 0.0
        %263 = vmatprep.subr.mxu0 0.0
        %264 = vmatpush1.msra.mxu0 0.0
        %265 = vmatprep.subr.mxu0 0.0
        %266 = vmatpush1.msra.mxu0 0.0
        %267 = vmatprep.subr.mxu0 0.0
        %268 = vmatpush1.msra.mxu0 0.0
        %269 = vmatprep.subr.mxu0 0.0
        %270 = vmatpush1.msra.mxu0 0.0
        %271 = vmatprep.subr.mxu0 0.0
        %272 = vmatpush1.msra.mxu0 0.0
        %273 = vmatprep.subr.mxu0 0.0
        %274 = vmatpush1.msra.mxu0 0.0
        %275 = vmatprep.subr.mxu0 0.0
        %276 = vmatpush1.msra.mxu0 0.0
        %277 = vmatprep.subr.mxu0 0.0
        %278 = vmatpush1.msra.mxu0 0.0
        %279 = vmatprep.subr.mxu0 0.0
        %280 = vmatpush1.msra.mxu0 0.0
        %281 = vmatprep.subr.mxu0 0.0
        %282 = vmatpush1.msra.mxu0 0.0
        %283 = vmatprep.subr.mxu0 0.0
        %284 = vmatpush1.msra.mxu0 0.0
        %285 = vmatprep.subr.mxu0 0.0
        %286 = vmatpush1.msra.mxu0 %v253
        %287 = vmatprep.subr.mxu0 0.0
        %288 = vmatpush2.msra.mxu0 0.0
        %289 = vmatprep.subr.mxu0 0.0
        %290 = vmatpush2.msra.mxu0 0.0
        %291 = vmatprep.subr.mxu0 0.0
        %292 = vmatpush2.msra.mxu0 0.0
        %293 = vmatprep.subr.mxu0 0.0
        %294 = vmatpush2.msra.mxu0 0.0
        %295 = vmatprep.subr.mxu0 0.0
        %296 = vmatpush2.msra.mxu0 0.0
        %297 = vmatprep.subr.mxu0 0.0
        %298 = vmatpush2.msra.mxu0 0.0
        %299 = vmatprep.subr.mxu0 0.0
        %300 = vmatpush2.msra.mxu0 0.0
        %301 = vmatprep.subr.mxu0 0.0
        %302 = vmatpush2.msra.mxu0 0.0
        %303 = vmatprep.subr.mxu0 0.0
        %304 = vmatpush2.msra.mxu0 0.0
        %305 = vmatprep.subr.mxu0 0.0
        %306 = vmatpush2.msra.mxu0 0.0
        %307 = vmatprep.subr.mxu0 0.0
        %308 = vmatpush2.msra.mxu0 0.0
        %309 = vmatprep.subr.mxu0 0.0
        %310 = vmatpush2.msra.mxu0 0.0
        %311 = vmatprep.subr.mxu0 0.0
        %312 = vmatpush2.msra.mxu0 0.0
        %313 = vmatprep.subr.mxu0 0.0
        %314 = vmatpush2.msra.mxu0 0.0
        %315 = vmatprep.subr.mxu0 0.0
        %316 = vmatpush2.msra.mxu0 0.0
        %317 = vmatprep.subr.mxu0 0.0
        %318 = vmatpush2.msra.mxu0 0.0
        %319 = vmatprep.mubr.f32.mxu0 0.0
        %320 = vmatmul.mubr.f32.gmra.mxu0 %v251
        %v321 = vpop.f32.mrf.mxu0
        %v322 = vadd.f32 %v247, %v321
        %v323 = vpop.f32.mrf.mxu0
        %324 = vdwg.mxu0
        %s325 = scalar_lea.vmem %s1, 16
        %v326 = vld [vmem:[%s325] sm:$0xff]
        %327 = vrot.lane.b32.xlu0 %v166, 126
        %v328 = vpop.permute.xlu0 %327
        %v330 = vsel %vm173, %v326, 0
        %v332 = vsel %vm177, %v328, 0
        %334 = vmatprep.subr.mxu0 0.0
        %335 = vmatpush1.msra.mxu0 0.0
        %336 = vmatprep.subr.mxu0 0.0
        %337 = vmatpush1.msra.mxu0 0.0
        %338 = vmatprep.subr.mxu0 0.0
        %339 = vmatpush1.msra.mxu0 0.0
        %340 = vmatprep.subr.mxu0 0.0
        %341 = vmatpush1.msra.mxu0 0.0
        %342 = vmatprep.subr.mxu0 0.0
        %343 = vmatpush1.msra.mxu0 0.0
        %344 = vmatprep.subr.mxu0 0.0
        %345 = vmatpush1.msra.mxu0 0.0
        %346 = vmatprep.subr.mxu0 0.0
        %347 = vmatpush1.msra.mxu0 0.0
        %348 = vmatprep.subr.mxu0 0.0
        %349 = vmatpush1.msra.mxu0 0.0
        %350 = vmatprep.subr.mxu0 0.0
        %351 = vmatpush1.msra.mxu0 0.0
        %352 = vmatprep.subr.mxu0 0.0
        %353 = vmatpush1.msra.mxu0 0.0
        %354 = vmatprep.subr.mxu0 0.0
        %355 = vmatpush1.msra.mxu0 0.0
        %356 = vmatprep.subr.mxu0 0.0
        %357 = vmatpush1.msra.mxu0 0.0
        %358 = vmatprep.subr.mxu0 0.0
        %359 = vmatpush1.msra.mxu0 0.0
        %360 = vmatprep.subr.mxu0 0.0
        %361 = vmatpush1.msra.mxu0 0.0
        %362 = vmatprep.subr.mxu0 0.0
        %363 = vmatpush1.msra.mxu0 0.0
        %364 = vmatprep.subr.mxu0 0.0
        %365 = vmatpush1.msra.mxu0 %v332
        %366 = vmatprep.subr.mxu0 0.0
        %367 = vmatpush2.msra.mxu0 0.0
        %368 = vmatprep.subr.mxu0 0.0
        %369 = vmatpush2.msra.mxu0 0.0
        %370 = vmatprep.subr.mxu0 0.0
        %371 = vmatpush2.msra.mxu0 0.0
        %372 = vmatprep.subr.mxu0 0.0
        %373 = vmatpush2.msra.mxu0 0.0
        %374 = vmatprep.subr.mxu0 0.0
        %375 = vmatpush2.msra.mxu0 0.0
        %376 = vmatprep.subr.mxu0 0.0
        %377 = vmatpush2.msra.mxu0 0.0
        %378 = vmatprep.subr.mxu0 0.0
        %379 = vmatpush2.msra.mxu0 0.0
        %380 = vmatprep.subr.mxu0 0.0
        %381 = vmatpush2.msra.mxu0 0.0
        %382 = vmatprep.subr.mxu0 0.0
        %383 = vmatpush2.msra.mxu0 0.0
        %384 = vmatprep.subr.mxu0 0.0
        %385 = vmatpush2.msra.mxu0 0.0
        %386 = vmatprep.subr.mxu0 0.0
        %387 = vmatpush2.msra.mxu0 0.0
        %388 = vmatprep.subr.mxu0 0.0
        %389 = vmatpush2.msra.mxu0 0.0
        %390 = vmatprep.subr.mxu0 0.0
        %391 = vmatpush2.msra.mxu0 0.0
        %392 = vmatprep.subr.mxu0 0.0
        %393 = vmatpush2.msra.mxu0 0.0
        %394 = vmatprep.subr.mxu0 0.0
        %395 = vmatpush2.msra.mxu0 0.0
        %396 = vmatprep.subr.mxu0 0.0
        %397 = vmatpush2.msra.mxu0 0.0
        %398 = vmatprep.mubr.f32.mxu0 0.0
        %399 = vmatmul.mubr.f32.gmra.mxu0 %v330
        %v400 = vpop.f32.mrf.mxu0
        %v401 = vadd.f32 0.0, %v400
        %v402 = vpop.f32.mrf.mxu0
        %403 = vdwg.mxu0
        %v404 = vadd.f32 %v322, %v401
        %v405 = vld [vmem:[%s2] sm:$0xff]
        %407 = vset.pattern.permute.xlu0 0
        %408 = vperm.xlu0 %407, %v405
        %v409 = vpop.permute.xlu0 %408
        %v411 = vadd.f32 %v404, %v409
        %vm412 = vcmask 130048
        %413 = vst.msk [vmem:[%s161] sm:$0xff] %vm412, %v411
        %s414 = sand.u32 %s93, 1
        %s415 = scalar_lea.sflag [#allocation3], %s414
        %s416 = sand.u32 %s93, 1
        %s417 = smul.addr %s416, 8
        %s418 = scalar_lea.vmem [#allocation2], %s417
        // Predicated region
        $region33: #{cnn_real_layer_1d.1} parent=31 // pred_check
          %p419 = pneg %p103
        $region34: #{cnn_real_layer_1d.1} parent=31 // pred_check_branch
          %421 = sbr.rel (%p419) target = $region36
        $region35: #{cnn_real_layer_1d.1} parent=31 // pred_region
          %s423 = ssub.s32 128, 128
          %424 = vsyncadd %s415, %s423
          %s425 = smul.addr %s17, 128
          %s426 = scalar_lea.hbm %s3, %s425
          %s428 = sshll.u32 %s418, 4
          %s429 = int_to_ptr.vmem [resolvable:$true] %s428
          %431 = dma.vmem_to_hbm [thread:$0]  %s429, 128, %s426, %s415
        $region36: #{cnn_real_layer_1d.1} parent=31 // pred_fallthru
          _
      $region32: #{cnn_real_layer_1d.1} parent=5 // pred_fallthru
        _
      %p432 = scmp.le.s32.totalorder 2, %s12
      // Predicated region
      $region37: #{cnn_real_layer_1d.1} parent=5 // pred_check
        %p433 = pneg %p432
      $region38: #{cnn_real_layer_1d.1} parent=5 // pred_check_branch
        %435 = sbr.rel (%p433) target = $region40
      $region39: #{cnn_real_layer_1d.1} parent=5 // pred_region
        %s436 = ssub.s32 %s12, 2
        // Predicated region
        $region41: #{cnn_real_layer_1d.1} parent=39 // pred_check
          %p437 = pneg %p109
        $region42: #{cnn_real_layer_1d.1} parent=39 // pred_check_branch
          %439 = sbr.rel (%p437) target = $region44
        $region43: #{cnn_real_layer_1d.1} parent=39 // pred_region
          %s440 = sand.u32 %s94, 1
          %s441 = scalar_lea.sflag [#allocation3], %s440
          %s442 = sand.u32 %s94, 1
          %s443 = smul.addr %s442, 8
          %s444 = scalar_lea.vmem [#allocation2], %s443
          %445 = dma.done %s441, 128
        $region44: #{cnn_real_layer_1d.1} parent=39 // pred_fallthru
          _
      $region40: #{cnn_real_layer_1d.1} parent=5 // pred_fallthru
        _
    $region6: #{cnn_real_layer_1d.1} parent=1 // loop_footer
      %s16 = sadd.s32 1, %s12
    $region7: #{cnn_real_layer_1d.1} parent=1 // loop_footer_branch
      %11 = sbr.rel target = $region3
    $region8: #{cnn_real_layer_1d.1} parent=1 // loop_exit
      _
    %446 = vsyncpa [#allocation3], 1
    %s447 = scalar_lea.sflag [#allocation3], 1
    %448 = vsyncpa %s447, 1

</llo_original>
